<compile_context>
chip_gen: v7x
topology: tpu7x:2x2x1
jax: 0.10.0
libtpu: 0.0.40
codegen_flags: <defaults>
</compile_context>

<pallas_src>
import math
from typing import NamedTuple

import jax
import jax.numpy as jnp
from jax import lax
from jax.experimental import pallas as pl
from jax.experimental.pallas import tpu as pltpu

_GELU_C = math.sqrt(2.0 / math.pi)


def _round_up(x, m):
    return ((x + m - 1) // m) * m


def _gelu_tanh(h):
    # 0.5 * x * (1 + tanh(sqrt(2/pi) * (x + 0.044715 * x^3)))  (f32 math)
    return 0.5 * h * (1.0 + jnp.tanh(_GELU_C * (h + 0.044715 * (h * h * h))))


def _vmem_capacity_bytes():
    try:
        return int(pltpu.get_tpu_info().vmem_capacity_bytes)
    except Exception:
        return 64 * 1024 * 1024  # conservative fallback (v7x physical)


def _pad_align(n):
    # 256-multiples fully feed the v6e/v7x 256-wide MXU; 128 for small dims.
    return _round_up(n, 256) if n >= 256 else _round_up(n, 128)


def _largest_chunk(h_p, cap=1024):
    """Largest multiple-of-128 divisor of h_p that is <= cap (h_p % 128 == 0)."""
    best = 128
    d = 128
    while d <= min(h_p, cap):
        if h_p % d == 0:
            best = d
        d += 128
    return best


def _choose_tm(m, tm_target):
    """M-tile size: minimize padding, multiple of 16, >=2 tiles for big M (v7x)."""
    tm_target = max(16, (tm_target // 16) * 16)
    n = max(1, -(-m // tm_target))
    if n == 1 and m > 128:
        n = 2  # guarantee >=2 M tiles so both v7x TensorCores get work
    return _round_up(-(-m // n), 16)


class FFNParams(NamedTuple):
    resident: bool
    emb: int
    hidden: int
    e_p: int
    h_p: int
    th: int
    w1: jax.Array
    b1: jax.Array
    w2: jax.Array
    b2: jax.Array


def prepare_ffn_params(w1, b1, w2, b2, *, compute_dtype=jnp.bfloat16):
    """One-time pad + cast (+ chunk layout for the resident path)."""
    E, H = w1.shape
    assert w2.shape == (H, E)
    cdt = jnp.dtype(compute_dtype)
    E_p, H_p = _pad_align(E), _pad_align(H)

    w1p = jnp.pad(w1, ((0, E_p - E), (0, H_p - H))).astype(cdt)
    w2p = jnp.pad(w2, ((0, H_p - H), (0, E_p - E))).astype(cdt)
    b1p = jnp.pad(jnp.reshape(b1, (1, -1)), ((0, 0), (0, H_p - H))).astype(jnp.float32)
    b2p = jnp.pad(jnp.reshape(b2, (1, -1)), ((0, 0), (0, E_p - E))).astype(jnp.float32)

    budget = int(0.75 * _vmem_capacity_bytes())
    c = cdt.itemsize
    th = _largest_chunk(H_p, cap=1024)

    # Residency gate: double-buffered weights + biases + a minimal (TM=128)
    # set of x/out/acc/hidden tiles must fit the planning budget.
    w_bytes = 2 * 2 * E_p * H_p * c + 2 * 4 * (H_p + E_p)
    per_row = 2 * E_p * c + 2 * E_p * 4 + E_p * 4 + th * (4 + c)
    resident = (w_bytes + 128 * per_row) <= budget

    if resident:
        n_chunks = H_p // th
        # Pre-chunk the hidden axis so the kernel uses well-supported
        # leading-axis dynamic indexing on the resident weight refs.
        w1p = jnp.transpose(w1p.reshape(E_p, n_chunks, th), (1, 0, 2))  # (n, E_p, th)
        w2p = w2p.reshape(n_chunks, th, E_p)                            # (n, th, E_p)
        b1p = b1p.reshape(n_chunks, 1, th)                              # (n, 1, th)

    return FFNParams(resident, E, H, E_p, H_p, th, w1p, b1p, w2p, b2p)


# ------------------------- kernels -------------------------

def _ffn_resident_kernel(x_ref, w1_ref, b1_ref, w2_ref, b2_ref, o_ref, acc_ref):
    # x_ref: (TM, E_p); w1_ref: (n, E_p, th); b1_ref: (n, 1, th)
    # w2_ref: (n, th, E_p); b2_ref: (1, E_p); o_ref: (TM, E_p); acc_ref f32 (TM, E_p)
    n_chunks = w1_ref.shape[0]
    x = x_ref[...]
    acc_ref[...] = jnp.zeros_like(acc_ref)

    def body(k, carry):
        h = jnp.dot(x, w1_ref[k], preferred_element_type=jnp.float32) + b1_ref[k]
        h = _gelu_tanh(h)
        acc_ref[...] += jnp.dot(h.astype(w2_ref.dtype), w2_ref[k],
                                preferred_element_type=jnp.float32)
        return carry

    lax.fori_loop(0, n_chunks, body, 0, unroll=(n_chunks <= 4))
    o_ref[...] = (acc_ref[...] + b2_ref[...]).astype(o_ref.dtype)


def _ffn_streaming_kernel(x_ref, w1_ref, b1_ref, w2_ref, b2_ref, o_ref, acc_ref):
    # 2-D grid (M tiles, H chunks); H is the reduction axis (last, "arbitrary").
    k = pl.program_id(1)

    @pl.when(k == 0)
    def _():
        acc_ref[...] = jnp.zeros_like(acc_ref)

    h = jnp.dot(x_ref[...], w1_ref[...], preferred_element_type=jnp.float32)
    h = _gelu_tanh(h + b1_ref[...])
    acc_ref[...] += jnp.dot(h.astype(w2_ref.dtype), w2_ref[...],
                            preferred_element_type=jnp.float32)

    @pl.when(k == pl.num_programs(1) - 1)
    def _():
        o_ref[...] = (acc_ref[...] + b2_ref[...]).astype(o_ref.dtype)


# ------------------------- wrapper -------------------------

def feedforward(x, params: FFNParams):
    """x: [batch, seq, emb] -> [batch, seq, emb]."""
    B, S, E = x.shape
    assert E == params.emb
    E_p, H_p, th = params.e_p, params.h_p, params.th
    M = B * S
    cdt = params.w1.dtype
    c = jnp.dtype(cdt).itemsize
    out_dtype = x.dtype
    o = jnp.dtype(out_dtype).itemsize

    cap = _vmem_capacity_bytes()
    budget = int(0.75 * cap)
    vmem_limit = int(0.85 * cap)

    if params.resident:
        n_chunks = H_p // th
        w_bytes = 2 * 2 * E_p * H_p * c + 2 * 4 * (H_p + E_p)
        per_row = 2 * E_p * c + 2 * E_p * o + E_p * 4 + th * (4 + c)
        tm_cap = max(16, (budget - w_bytes) // per_row)
        tm_target = min(512, max(16, (tm_cap // 16) * 16))
        TM = _choose_tm(M, tm_target)
        M_p = _round_up(M, TM)
        x2d = jnp.pad(x.reshape(M, E), ((0, M_p - M), (0, E_p - E))).astype(cdt)

        cost = pl.CostEstimate(
            flops=4 * M_p * E_p * H_p,
            transcendentals=M_p * H_p,
            bytes_accessed=(M_p * E_p * (c + o)          # x in, out
                            + 2 * E_p * H_p * c          # weights fetched once
                            + (H_p + E_p) * 4))          # biases

        out2d = pl.pallas_call(
            _ffn_resident_kernel,
            out_shape=jax.ShapeDtypeStruct((M_p, E_p), out_dtype),
            grid_spec=pltpu.PrefetchScalarGridSpec(
                num_scalar_prefetch=0,
                grid=(M_p // TM,),
                in_specs=[
                    pl.BlockSpec((TM, E_p), lambda i: (i, 0)),
                    # Weights/biases: full blocks, constant index map -> VMEM-resident.
                    pl.BlockSpec((n_chunks, E_p, th), lambda i: (0, 0, 0)),
                    pl.BlockSpec((n_chunks, 1, th), lambda i: (0, 0, 0)),
                    pl.BlockSpec((n_chunks, th, E_p), lambda i: (0, 0, 0)),
                    pl.BlockSpec((1, E_p), lambda i: (0, 0)),
                ],
                out_specs=pl.BlockSpec((TM, E_p), lambda i: (i, 0)),
                scratch_shapes=[pltpu.VMEM((TM, E_p), jnp.float32)],
            ),
            compiler_params=pltpu.CompilerParams(
                dimension_semantics=("parallel",),
                vmem_limit_bytes=vmem_limit,
            ),
            cost_estimate=cost,
        )(x2d, params.w1, params.b1, params.w2, params.b2)

    else:
        # Streaming fallback for weights too large for VMEM residency.
        TH = th

        def stream_bytes(tm, thc):
            return (2 * (tm * E_p * c + E_p * thc * c + thc * 4
                         + thc * E_p * c + E_p * 4 + tm * E_p * o)
                    + tm * E_p * 4 + tm * thc * (4 + c))

        while TH > 128 and stream_bytes(128, TH) > budget:
            TH = _largest_chunk(H_p, cap=TH - 128)

        fixed_s = 2 * (E_p * TH * c + TH * E_p * c + TH * 4 + E_p * 4)
        per_row_s = 2 * E_p * c + 2 * E_p * o + E_p * 4 + TH * (4 + c)
        tm_cap = max(16, (budget - fixed_s) // per_row_s)
        tm_target = min(1024, max(16, (tm_cap // 16) * 16))  # aim above HBM ridge
        TM = _choose_tm(M, tm_target)
        M_p = _round_up(M, TM)
        x2d = jnp.pad(x.reshape(M, E), ((0, M_p - M), (0, E_p - E))).astype(cdt)

        cost = pl.CostEstimate(
            flops=4 * M_p * E_p * H_p,
            transcendentals=M_p * H_p,
            bytes_accessed=(M_p * E_p * (c + o)
                            + (M_p // TM) * 2 * E_p * H_p * c  # weights re-streamed per M tile
                            + (H_p + E_p) * 4))

        out2d = pl.pallas_call(
            _ffn_streaming_kernel,
            out_shape=jax.ShapeDtypeStruct((M_p, E_p), out_dtype),
            grid_spec=pltpu.PrefetchScalarGridSpec(
                num_scalar_prefetch=0,
                grid=(M_p // TM, H_p // TH),
                in_specs=[
                    pl.BlockSpec((TM, E_p), lambda i, k: (i, 0)),
                    pl.BlockSpec((E_p, TH), lambda i, k: (0, k)),
                    pl.BlockSpec((1, TH), lambda i, k: (0, k)),
                    pl.BlockSpec((TH, E_p), lambda i, k: (k, 0)),
                    pl.BlockSpec((1, E_p), lambda i, k: (0, 0)),
                ],
                out_specs=pl.BlockSpec((TM, E_p), lambda i, k: (i, 0)),
                scratch_shapes=[pltpu.VMEM((TM, E_p), jnp.float32)],
            ),
            compiler_params=pltpu.CompilerParams(
                dimension_semantics=("parallel", "arbitrary"),
                vmem_limit_bytes=vmem_limit,
            ),
            cost_estimate=cost,
        )(x2d, params.w1, params.b1, params.w2, params.b2)

    return out2d[:M, :E].reshape(B, S, E)


def init_params(key, emb_dim):
    """Deterministic init mimicking nn.Linear defaults (uniform +/- 1/sqrt(fan_in))."""
    hidden = 4 * emb_dim
    k1, k2, k3, k4 = jax.random.split(key, 4)
    bound1 = 1.0 / math.sqrt(emb_dim)
    bound2 = 1.0 / math.sqrt(hidden)
    w1 = jax.random.uniform(k1, (emb_dim, hidden), jnp.float32, -bound1, bound1)
    b1 = jax.random.uniform(k2, (1, hidden), jnp.float32, -bound1, bound1)
    w2 = jax.random.uniform(k3, (hidden, emb_dim), jnp.float32, -bound2, bound2)
    b2 = jax.random.uniform(k4, (1, emb_dim), jnp.float32, -bound2, bound2)
    return w1, b1, w2, b2


if __name__ == "__main__":
    key = jax.random.PRNGKey(0)
    batch, seq, emb_dim = 2, 8, 32  # hidden = 4 * emb_dim = 128

    kx, kp = jax.random.split(key)
    x = jax.random.normal(kx, (batch, seq, emb_dim), jnp.float32)
    w1, b1, w2, b2 = init_params(kp, emb_dim)

    # One-time weight preparation (pad + bf16 cast + chunk layout), then run.
    params = prepare_ffn_params(w1, b1, w2, b2)
    out = feedforward(x, params)
    jax.block_until_ready(out)

    # Reference mimicking the kernel's numerics: bf16 operands, f32 accumulate,
    # f32 tanh-GELU (same math as the PyTorch module).
    def ref(xx):
        bf, f32 = jnp.bfloat16, jnp.float32
        xq = xx.astype(bf).astype(f32)
        w1q = w1.astype(bf).astype(f32)
        w2q = w2.astype(bf).astype(f32)
        h = jnp.einsum("bse,eh->bsh", xq, w1q,
                       precision=jax.lax.Precision.HIGHEST) + b1.reshape(1, 1, -1)
        cc = math.sqrt(2.0 / math.pi)
        h = 0.5 * h * (1.0 + jnp.tanh(cc * (h + 0.044715 * h ** 3)))
        hq = h.astype(bf).astype(f32)
        return jnp.einsum("bsh,he->bse", hq, w2q,
                          precision=jax.lax.Precision.HIGHEST) + b2.reshape(1, 1, -1)

    expected = ref(x)
    assert out.shape == (batch, seq, emb_dim)
    assert jnp.allclose(out, expected, atol=2e-3, rtol=2e-3), (
        float(jnp.max(jnp.abs(out - expected))))
    print("KERNEL_OK")
</pallas_src>

<mosaic_0001>
module attributes {stable_mosaic.version = 11 : i64} {
  func.func @_ffn_resident_kernel(%arg0: i32, %arg1: memref<16x128xbf16, #tpu.memory_space<vmem>>, %arg2: memref<1x128x128xbf16, #tpu.memory_space<vmem>>, %arg3: memref<1x1x128xf32, #tpu.memory_space<vmem>>, %arg4: memref<1x128x128xbf16, #tpu.memory_space<vmem>>, %arg5: memref<1x128xf32, #tpu.memory_space<vmem>>, %arg6: memref<16x128xf32, #tpu.memory_space<vmem>>, %arg7: memref<16x128xf32, #tpu.memory_space<vmem>>) attributes {dimension_semantics = [#tpu.dimension_semantics<parallel>], iteration_bounds = array<i64: 1>, scalar_prefetch = 0 : i64, scratch_operands = 1 : i64, tpu.core_type = #tpu.core_type<tc>, window_params = [{transform_indices = @transform_0, window_bounds = array<i64: 16, 128>}, {pipeline_mode = #tpu.pipeline_mode<synchronous>, transform_indices = @transform_1, window_bounds = array<i64: 1, 128, 128>}, {pipeline_mode = #tpu.pipeline_mode<synchronous>, transform_indices = @transform_2, window_bounds = array<i64: 1, 1, 128>}, {pipeline_mode = #tpu.pipeline_mode<synchronous>, transform_indices = @transform_3, window_bounds = array<i64: 1, 128, 128>}, {pipeline_mode = #tpu.pipeline_mode<synchronous>, transform_indices = @transform_4, window_bounds = array<i64: 1, 128>}, {transform_indices = @transform_5, window_bounds = array<i64: 16, 128>}]} {
    %c0 = arith.constant 0 : index
    %c0_0 = arith.constant 0 : index
    %0 = vector.load %arg1[%c0, %c0_0] : memref<16x128xbf16, #tpu.memory_space<vmem>>, vector<16x128xbf16>
    %cst = arith.constant 0.000000e+00 : f32
    %1 = vector.broadcast %cst : f32 to vector<16x128xf32>
    %c0_1 = arith.constant 0 : index
    %c0_2 = arith.constant 0 : index
    %2 = vector.load %arg7[%c0_1, %c0_2] : memref<16x128xf32, #tpu.memory_space<vmem>>, vector<16x128xf32>
    tpu.vector_store %arg7[%c0_1, %c0_2], %1 {strides = array<i32>} : memref<16x128xf32, #tpu.memory_space<vmem>>, vector<16x128xf32>,
    %c0_i32 = arith.constant 0 : i32
    %3 = arith.index_cast %c0_i32 : i32 to index
    %c0_3 = arith.constant 0 : index
    %c0_4 = arith.constant 0 : index
    %4 = vector.load %arg2[%3, %c0_3, %c0_4] : memref<1x128x128xbf16, #tpu.memory_space<vmem>>, vector<1x128x128xbf16>
    %5 = vector.shape_cast %4 : vector<1x128x128xbf16> to vector<128x128xbf16>
    %cst_5 = arith.constant dense<0.000000e+00> : vector<16x128xf32>
    %6 = tpu.matmul %0, %5, %cst_5 {dimension_numbers = #tpu.dot_dimension_numbers<[1], [0], [0], [1], [0, 0, 1, 1], [], []>} : vector<16x128xbf16>, vector<128x128xbf16>, vector<16x128xf32> -> vector<16x128xf32>
    %7 = arith.index_cast %c0_i32 : i32 to index
    %c0_6 = arith.constant 0 : index
    %c0_7 = arith.constant 0 : index
    %8 = vector.load %arg3[%7, %c0_6, %c0_7] : memref<1x1x128xf32, #tpu.memory_space<vmem>>, vector<1x1x128xf32>
    %9 = vector.shape_cast %8 : vector<1x1x128xf32> to vector<1x128xf32>
    %10 = vector.broadcast %9 : vector<1x128xf32> to vector<16x128xf32>
    %11 = arith.addf %6, %10 : vector<16x128xf32>
    %cst_8 = arith.constant 5.000000e-01 : f32
    %12 = vector.broadcast %cst_8 : f32 to vector<16x128xf32>
    %13 = arith.mulf %12, %11 : vector<16x128xf32>
    %14 = arith.mulf %11, %11 : vector<16x128xf32>
    %15 = arith.mulf %14, %11 : vector<16x128xf32>
    %cst_9 = arith.constant 4.471500e-02 : f32
    %16 = vector.broadcast %cst_9 : f32 to vector<16x128xf32>
    %17 = arith.mulf %16, %15 : vector<16x128xf32>
    %18 = arith.addf %11, %17 : vector<16x128xf32>
    %cst_10 = arith.constant 0.797884583 : f32
    %19 = vector.broadcast %cst_10 : f32 to vector<16x128xf32>
    %20 = arith.mulf %19, %18 : vector<16x128xf32>
    %21 = math.tanh %20 : vector<16x128xf32>
    %cst_11 = arith.constant 1.000000e+00 : f32
    %22 = vector.broadcast %cst_11 : f32 to vector<16x128xf32>
    %23 = arith.addf %22, %21 : vector<16x128xf32>
    %24 = arith.mulf %13, %23 : vector<16x128xf32>
    %c0_12 = arith.constant 0 : index
    %c0_13 = arith.constant 0 : index
    %25 = vector.load %arg7[%c0_12, %c0_13] : memref<16x128xf32, #tpu.memory_space<vmem>>, vector<16x128xf32>
    %26 = arith.truncf %24 : vector<16x128xf32> to vector<16x128xbf16>
    %27 = arith.index_cast %c0_i32 : i32 to index
    %c0_14 = arith.constant 0 : index
    %c0_15 = arith.constant 0 : index
    %28 = vector.load %arg4[%27, %c0_14, %c0_15] : memref<1x128x128xbf16, #tpu.memory_space<vmem>>, vector<1x128x128xbf16>
    %29 = vector.shape_cast %28 : vector<1x128x128xbf16> to vector<128x128xbf16>
    %cst_16 = arith.constant dense<0.000000e+00> : vector<16x128xf32>
    %30 = tpu.matmul %26, %29, %cst_16 {dimension_numbers = #tpu.dot_dimension_numbers<[1], [0], [0], [1], [0, 0, 1, 1], [], []>} : vector<16x128xbf16>, vector<128x128xbf16>, vector<16x128xf32> -> vector<16x128xf32>
    %31 = arith.addf %25, %30 : vector<16x128xf32>
    %c0_17 = arith.constant 0 : index
    %c0_18 = arith.constant 0 : index
    %32 = vector.load %arg7[%c0_17, %c0_18] : memref<16x128xf32, #tpu.memory_space<vmem>>, vector<16x128xf32>
    tpu.vector_store %arg7[%c0_17, %c0_18], %31 {strides = array<i32>} : memref<16x128xf32, #tpu.memory_space<vmem>>, vector<16x128xf32>,
    %c1_i32 = arith.constant 1 : i32
    %c0_19 = arith.constant 0 : index
    %c0_20 = arith.constant 0 : index
    %33 = vector.load %arg7[%c0_19, %c0_20] : memref<16x128xf32, #tpu.memory_space<vmem>>, vector<16x128xf32>
    %c0_21 = arith.constant 0 : index
    %c0_22 = arith.constant 0 : index
    %34 = vector.load %arg5[%c0_21, %c0_22] : memref<1x128xf32, #tpu.memory_space<vmem>>, vector<1x128xf32>
    %35 = vector.broadcast %34 : vector<1x128xf32> to vector<16x128xf32>
    %36 = arith.addf %33, %35 : vector<16x128xf32>
    %c0_23 = arith.constant 0 : index
    %c0_24 = arith.constant 0 : index
    %37 = vector.load %arg6[%c0_23, %c0_24] : memref<16x128xf32, #tpu.memory_space<vmem>>, vector<16x128xf32>
    tpu.vector_store %arg6[%c0_23, %c0_24], %36 {strides = array<i32>} : memref<16x128xf32, #tpu.memory_space<vmem>>, vector<16x128xf32>,
    return
  }
  func.func @transform_0(%arg0: i32) -> (i32, i32) {
    %c0_i32 = arith.constant 0 : i32
    %c0_i32_0 = arith.constant 0 : i32
    return %arg0, %c0_i32 : i32, i32
  }
  func.func @transform_1(%arg0: i32) -> (i32, i32, i32) {
    %c0_i32 = arith.constant 0 : i32
    %c0_i32_0 = arith.constant 0 : i32
    %c0_i32_1 = arith.constant 0 : i32
    %c0_i32_2 = arith.constant 0 : i32
    return %c0_i32, %c0_i32_0, %c0_i32_1 : i32, i32, i32
  }
  func.func @transform_2(%arg0: i32) -> (i32, i32, i32) {
    %c0_i32 = arith.constant 0 : i32
    %c0_i32_0 = arith.constant 0 : i32
    %c0_i32_1 = arith.constant 0 : i32
    %c0_i32_2 = arith.constant 0 : i32
    return %c0_i32, %c0_i32_0, %c0_i32_1 : i32, i32, i32
  }
  func.func @transform_3(%arg0: i32) -> (i32, i32, i32) {
    %c0_i32 = arith.constant 0 : i32
    %c0_i32_0 = arith.constant 0 : i32
    %c0_i32_1 = arith.constant 0 : i32
    %c0_i32_2 = arith.constant 0 : i32
    return %c0_i32, %c0_i32_0, %c0_i32_1 : i32, i32, i32
  }
  func.func @transform_4(%arg0: i32) -> (i32, i32) {
    %c0_i32 = arith.constant 0 : i32
    %c0_i32_0 = arith.constant 0 : i32
    %c0_i32_1 = arith.constant 0 : i32
    return %c0_i32, %c0_i32_0 : i32, i32
  }
  func.func @transform_5(%arg0: i32) -> (i32, i32) {
    %c0_i32 = arith.constant 0 : i32
    %c0_i32_0 = arith.constant 0 : i32
    return %arg0, %c0_i32 : i32, i32
  }
}

</mosaic_0001>

<llo_original>
// kernel: tpu_custom_call.1
$region0: #{tpu_custom_call.1}
  #allocation0 [shape = 'u32[]', space=smem, size = 0x4, offset = 0x4, fixed_abs, tag = 'smem constant byte address 0x4 - core index']
  #allocation1 [shape = 'u32[144,128]{1,0:T(1,128)}', space=vmem, size = 0x12000, scoped, tag = 'internal scratch']
  #allocation2 [shape = 'f32[16,128]{1,0:T(8,128)}', space=vmem, size = 0x2000, scoped, tag = 'scratch operand']
  %s0 = inlined_call_operand.hbm [shape: bf16[16,128], index: 0, kind: input, shape index: {}]
  %s1 = inlined_call_operand.hbm [shape: bf16[1,128,128], index: 1, kind: input, shape index: {}]
  %s2 = inlined_call_operand.vmem [shape: f32[1,1,128], index: 2, kind: input, shape index: {}]
  %s3 = inlined_call_operand.hbm [shape: bf16[1,128,128], index: 3, kind: input, shape index: {}]
  %s4 = inlined_call_operand.vmem [shape: f32[1,128], index: 4, kind: input, shape index: {}]
  %s5 = inlined_call_operand.hbm [shape: f32[16,128], index: 5, kind: output, shape index: {}]
  %s6 = sld [smem:[#allocation0]]
  $region42: #{tpu_custom_call.1} parent=0
    _
  %s8 = ssub.s32 1, %s6
  %s9 = scalar_select 0, %s8, %s6
  $region1: #{tpu_custom_call.1} parent=0
    #allocation3 [shape = 'u8[4096]{0}', space=vmem, size = 0x1000, scoped, tag = 'input window, operand 0, single buffered']
    #allocation4 [shape = 's32[1]{0}', space=sflag, size = 0x4, scoped, tag = 'scoped memory for tpu_custom_call.1']
    #allocation5 [shape = 's32[1]{0}', space=sflag, size = 0x4, scoped, tag = 'scoped memory for tpu_custom_call.1']
    #allocation6 [shape = 'u8[32768]{0}', space=vmem, size = 0x8000, scoped, tag = 'input window, operand 1, single buffered']
    #allocation7 [shape = 's32[1]{0}', space=sflag, size = 0x4, scoped, tag = 'scoped memory for tpu_custom_call.1']
    #allocation8 [shape = 'u8[32768]{0}', space=vmem, size = 0x8000, scoped, tag = 'input window, operand 3, single buffered']
    #allocation9 [shape = 'u8[8192]{0}', space=vmem, size = 0x2000, scoped, tag = 'output window, operand 0, single buffered']
    %10 = vsyncpa [#allocation4], 0
    %11 = vsyncpa [#allocation7], 0
    %12 = vsyncpa [#allocation5], 0
    // Predicated region
    $region2: #{tpu_custom_call.1} parent=1 // pred_check
      _
    $region3: #{tpu_custom_call.1} parent=1 // pred_check_branch
      %14 = sbr.rel (0) target = $region5
    $region4: #{tpu_custom_call.1} parent=1 // pred_region
      %s16 = ssub.s32 128, 128
      %17 = vsyncadd [#allocation4], %s16
      %s18 = sshll.u32 [#allocation3], 4
      %s19 = int_to_ptr.vmem [resolvable:$true] %s18
      %24 = dma.hbm_to_vmem [thread:$0]  %s0, 128, %s19, [#allocation4], 64, 64, 4
    $region5: #{tpu_custom_call.1} parent=1 // pred_fallthru
      _
    // Predicated region
    $region6: #{tpu_custom_call.1} parent=1 // pred_check
      _
    $region7: #{tpu_custom_call.1} parent=1 // pred_check_branch
      %26 = sbr.rel (0) target = $region9
    $region8: #{tpu_custom_call.1} parent=1 // pred_region
      %s28 = ssub.s32 1024, 1024
      %29 = vsyncadd [#allocation7], %s28
      %s30 = sshll.u32 [#allocation6], 4
      %s31 = int_to_ptr.vmem [resolvable:$true] %s30
      %36 = dma.hbm_to_vmem [thread:$0]  %s1, 1024, %s31, [#allocation7], 64, 64, 4
    $region9: #{tpu_custom_call.1} parent=1 // pred_fallthru
      _
    // Predicated region
    $region10: #{tpu_custom_call.1} parent=1 // pred_check
      _
    $region11: #{tpu_custom_call.1} parent=1 // pred_check_branch
      %38 = sbr.rel (0) target = $region13
    $region12: #{tpu_custom_call.1} parent=1 // pred_region
      _
    $region13: #{tpu_custom_call.1} parent=1 // pred_fallthru
      _
    // Predicated region
    $region14: #{tpu_custom_call.1} parent=1 // pred_check
      _
    $region15: #{tpu_custom_call.1} parent=1 // pred_check_branch
      %40 = sbr.rel (0) target = $region17
    $region16: #{tpu_custom_call.1} parent=1 // pred_region
      %s42 = ssub.s32 1024, 1024
      %43 = vsyncadd [#allocation7], %s42
      %s44 = sshll.u32 [#allocation8], 4
      %s45 = int_to_ptr.vmem [resolvable:$true] %s44
      %50 = dma.hbm_to_vmem [thread:$0]  %s3, 1024, %s45, [#allocation7], 64, 64, 4
    $region17: #{tpu_custom_call.1} parent=1 // pred_fallthru
      _
    // Predicated region
    $region18: #{tpu_custom_call.1} parent=1 // pred_check
      _
    $region19: #{tpu_custom_call.1} parent=1 // pred_check_branch
      %52 = sbr.rel (0) target = $region21
    $region20: #{tpu_custom_call.1} parent=1 // pred_region
      _
    $region21: #{tpu_custom_call.1} parent=1 // pred_fallthru
      _
    // Predicated region
    $region22: #{tpu_custom_call.1} parent=1 // pred_check
      _
    $region23: #{tpu_custom_call.1} parent=1 // pred_check_branch
      %54 = sbr.rel (0) target = $region25
    $region24: #{tpu_custom_call.1} parent=1 // pred_region
      %55 = dma.done [#allocation4], 128
    $region25: #{tpu_custom_call.1} parent=1 // pred_fallthru
      _
    // Predicated region
    $region26: #{tpu_custom_call.1} parent=1 // pred_check
      _
    $region27: #{tpu_custom_call.1} parent=1 // pred_check_branch
      %57 = sbr.rel (0) target = $region29
    $region28: #{tpu_custom_call.1} parent=1 // pred_region
      %58 = dma.done [#allocation7], 1024
    $region29: #{tpu_custom_call.1} parent=1 // pred_fallthru
      _
    // Predicated region
    $region30: #{tpu_custom_call.1} parent=1 // pred_check
      _
    $region31: #{tpu_custom_call.1} parent=1 // pred_check_branch
      %60 = sbr.rel (0) target = $region33
    $region32: #{tpu_custom_call.1} parent=1 // pred_region
      %61 = dma.done [#allocation7], 1024
    $region33: #{tpu_custom_call.1} parent=1 // pred_fallthru
      _
    %v63 = vld [vmem:[#allocation3] sm:$0xf]
    %v64 = vld [vmem:[#allocation3 + $0x4] sm:$0xf]
    %65 = vst [vmem:[#allocation2] sm:$0xff] 0.0
    %66 = vst [vmem:[#allocation2 + $0x8] sm:$0xff] 0.0
    %v67 = vld [vmem:[#allocation6] sm:$0xf]
    %v68 = vld [vmem:[#allocation6 + $0x4] sm:$0xf]
    %v69 = vld [vmem:[#allocation6 + $0x8] sm:$0xf]
    %v70 = vld [vmem:[#allocation6 + $0xc] sm:$0xf]
    %v71 = vld [vmem:[#allocation6 + $0x10] sm:$0xf]
    %v72 = vld [vmem:[#allocation6 + $0x14] sm:$0xf]
    %v73 = vld [vmem:[#allocation6 + $0x18] sm:$0xf]
    %v74 = vld [vmem:[#allocation6 + $0x1c] sm:$0xf]
    %v75 = vld [vmem:[#allocation6 + $0x20] sm:$0xf]
    %v76 = vld [vmem:[#allocation6 + $0x24] sm:$0xf]
    %v77 = vld [vmem:[#allocation6 + $0x28] sm:$0xf]
    %v78 = vld [vmem:[#allocation6 + $0x2c] sm:$0xf]
    %v79 = vld [vmem:[#allocation6 + $0x30] sm:$0xf]
    %v80 = vld [vmem:[#allocation6 + $0x34] sm:$0xf]
    %v81 = vld [vmem:[#allocation6 + $0x38] sm:$0xf]
    %v82 = vld [vmem:[#allocation6 + $0x3c] sm:$0xf]
    %v83 = vld [vmem:[%s2] sm:$0x1]
    %v85 = vlaneseq
    %v86 = vshrl.u32 %v85, 7
    %v87 = vsub.s32 0, %v86
    %v88 = vrot.slane %v83, %v87
    %v92 = vunpack.c.l.b16 %v63
    %v93 = vunpack.c.l.b16 %v64
    %v94 = vpack.c.b16 %v93, %v92
    %v112 = vunpack.c.l.b16 %v67
    %v113 = vunpack.c.l.b16 %v68
    %v114 = vunpack.c.l.b16 %v69
    %v115 = vunpack.c.l.b16 %v70
    %v116 = vunpack.c.l.b16 %v71
    %v117 = vunpack.c.l.b16 %v72
    %v118 = vunpack.c.l.b16 %v73
    %v119 = vunpack.c.l.b16 %v74
    %v120 = vunpack.c.l.b16 %v75
    %v121 = vunpack.c.l.b16 %v76
    %v122 = vunpack.c.l.b16 %v77
    %v123 = vunpack.c.l.b16 %v78
    %v124 = vunpack.c.l.b16 %v79
    %v125 = vunpack.c.l.b16 %v80
    %v126 = vunpack.c.l.b16 %v81
    %v127 = vunpack.c.l.b16 %v82
    %v128 = vpack.c.b16 %v113, %v112
    %v129 = vpack.c.b16 %v115, %v114
    %v130 = vpack.c.b16 %v117, %v116
    %v131 = vpack.c.b16 %v119, %v118
    %v132 = vpack.c.b16 %v121, %v120
    %v133 = vpack.c.b16 %v123, %v122
    %v134 = vpack.c.b16 %v125, %v124
    %v135 = vpack.c.b16 %v127, %v126
    %144 = vmatprep.subr.bf16.mxu0 0
    %145 = vmatpush1.bf16.msra.mxu0 %v128
    %146 = vmatprep.subr.bf16.mxu0 0
    %147 = vmatpush1.bf16.msra.mxu0 %v129
    %148 = vmatprep.subr.bf16.mxu0 0
    %149 = vmatpush1.bf16.msra.mxu0 %v130
    %150 = vmatprep.subr.bf16.mxu0 0
    %151 = vmatpush1.bf16.msra.mxu0 %v131
    %152 = vmatprep.subr.bf16.mxu0 0
    %153 = vmatpush1.bf16.msra.mxu0 %v132
    %154 = vmatprep.subr.bf16.mxu0 0
    %155 = vmatpush1.bf16.msra.mxu0 %v133
    %156 = vmatprep.subr.bf16.mxu0 0
    %157 = vmatpush1.bf16.msra.mxu0 %v134
    %158 = vmatprep.subr.bf16.mxu0 0
    %159 = vmatpush1.bf16.msra.mxu0 %v135
    %160 = vmatprep.subr.bf16.mxu0 0
    %161 = vmatpush1.bf16.msra.mxu0 0
    %162 = vmatprep.subr.bf16.mxu0 0
    %163 = vmatpush1.bf16.msra.mxu0 0
    %164 = vmatprep.subr.bf16.mxu0 0
    %165 = vmatpush1.bf16.msra.mxu0 0
    %166 = vmatprep.subr.bf16.mxu0 0
    %167 = vmatpush1.bf16.msra.mxu0 0
    %168 = vmatprep.subr.bf16.mxu0 0
    %169 = vmatpush1.bf16.msra.mxu0 0
    %170 = vmatprep.subr.bf16.mxu0 0
    %171 = vmatpush1.bf16.msra.mxu0 0
    %172 = vmatprep.subr.bf16.mxu0 0
    %173 = vmatpush1.bf16.msra.mxu0 0
    %174 = vmatprep.subr.bf16.mxu0 0
    %175 = vmatpush1.bf16.msra.mxu0 0
    %176 = vmatprep.mubr.bf16.mxu0 0
    %177 = vmatmul.mubr.bf16.gmra.mrb[0].mxu0 %v94
    %v178 = vpop.f32.mrb[0].mxu0
    %v179 = vadd.f32 %v88, %v178
    %v180 = vpop.f32.mrb[0].mxu0
    %v181 = vpop.f32.mrb[0].mxu0
    %v182 = vadd.f32 %v88, %v181
    %v183 = vpop.f32.mrb[0].mxu0
    %184 = vdwg.mxu0
    %v185 = vmul.f32 %v179, 0.5
    %v186 = vmul.f32 %v182, 0.5
    %v187 = vmul.f32 %v179, %v179
    %v188 = vmul.f32 %v182, %v182
    %v189 = vmul.f32 %v187, %v179
    %v190 = vmul.f32 %v188, %v182
    %v191 = vmul.f32 %v189, 0.044715
    %v192 = vmul.f32 %v190, 0.044715
    %v193 = vadd.f32 %v179, %v191
    %v194 = vadd.f32 %v182, %v192
    %v195 = vmul.f32 %v193, 0.7978846
    %v196 = vmul.f32 %v194, 0.7978846
    %v197 = vtanh.pop %v195
    %v198 = vtanh.pop %v196
    %v199 = vadd.f32 %v197, 1.0
    %v200 = vadd.f32 %v198, 1.0
    %v201 = vmul.f32 %v185, %v199
    %v202 = vmul.f32 %v186, %v200
    %v203 = vld [vmem:[#allocation2] sm:$0xff]
    %v204 = vld [vmem:[#allocation2 + $0x8] sm:$0xff]
    %v205 = vpack.c.bf16 %v202, %v201
    %v206 = vld [vmem:[#allocation8] sm:$0xf]
    %v207 = vld [vmem:[#allocation8 + $0x4] sm:$0xf]
    %v208 = vld [vmem:[#allocation8 + $0x8] sm:$0xf]
    %v209 = vld [vmem:[#allocation8 + $0xc] sm:$0xf]
    %v210 = vld [vmem:[#allocation8 + $0x10] sm:$0xf]
    %v211 = vld [vmem:[#allocation8 + $0x14] sm:$0xf]
    %v212 = vld [vmem:[#allocation8 + $0x18] sm:$0xf]
    %v213 = vld [vmem:[#allocation8 + $0x1c] sm:$0xf]
    %v214 = vld [vmem:[#allocation8 + $0x20] sm:$0xf]
    %v215 = vld [vmem:[#allocation8 + $0x24] sm:$0xf]
    %v216 = vld [vmem:[#allocation8 + $0x28] sm:$0xf]
    %v217 = vld [vmem:[#allocation8 + $0x2c] sm:$0xf]
    %v218 = vld [vmem:[#allocation8 + $0x30] sm:$0xf]
    %v219 = vld [vmem:[#allocation8 + $0x34] sm:$0xf]
    %v220 = vld [vmem:[#allocation8 + $0x38] sm:$0xf]
    %v221 = vld [vmem:[#allocation8 + $0x3c] sm:$0xf]
    %v238 = vunpack.c.l.b16 %v206
    %v239 = vunpack.c.l.b16 %v207
    %v240 = vunpack.c.l.b16 %v208
    %v241 = vunpack.c.l.b16 %v209
    %v242 = vunpack.c.l.b16 %v210
    %v243 = vunpack.c.l.b16 %v211
    %v244 = vunpack.c.l.b16 %v212
    %v245 = vunpack.c.l.b16 %v213
    %v246 = vunpack.c.l.b16 %v214
    %v247 = vunpack.c.l.b16 %v215
    %v248 = vunpack.c.l.b16 %v216
    %v249 = vunpack.c.l.b16 %v217
    %v250 = vunpack.c.l.b16 %v218
    %v251 = vunpack.c.l.b16 %v219
    %v252 = vunpack.c.l.b16 %v220
    %v253 = vunpack.c.l.b16 %v221
    %v254 = vpack.c.b16 %v239, %v238
    %v255 = vpack.c.b16 %v241, %v240
    %v256 = vpack.c.b16 %v243, %v242
    %v257 = vpack.c.b16 %v245, %v244
    %v258 = vpack.c.b16 %v247, %v246
    %v259 = vpack.c.b16 %v249, %v248
    %v260 = vpack.c.b16 %v251, %v250
    %v261 = vpack.c.b16 %v253, %v252
    %270 = vmatprep.subr.bf16.mxu0 0
    %271 = vmatpush1.bf16.msra.mxu0 %v254
    %272 = vmatprep.subr.bf16.mxu0 0
    %273 = vmatpush1.bf16.msra.mxu0 %v255
    %274 = vmatprep.subr.bf16.mxu0 0
    %275 = vmatpush1.bf16.msra.mxu0 %v256
    %276 = vmatprep.subr.bf16.mxu0 0
    %277 = vmatpush1.bf16.msra.mxu0 %v257
    %278 = vmatprep.subr.bf16.mxu0 0
    %279 = vmatpush1.bf16.msra.mxu0 %v258
    %280 = vmatprep.subr.bf16.mxu0 0
    %281 = vmatpush1.bf16.msra.mxu0 %v259
    %282 = vmatprep.subr.bf16.mxu0 0
    %283 = vmatpush1.bf16.msra.mxu0 %v260
    %284 = vmatprep.subr.bf16.mxu0 0
    %285 = vmatpush1.bf16.msra.mxu0 %v261
    %286 = vmatprep.subr.bf16.mxu0 0
    %287 = vmatpush1.bf16.msra.mxu0 0
    %288 = vmatprep.subr.bf16.mxu0 0
    %289 = vmatpush1.bf16.msra.mxu0 0
    %290 = vmatprep.subr.bf16.mxu0 0
    %291 = vmatpush1.bf16.msra.mxu0 0
    %292 = vmatprep.subr.bf16.mxu0 0
    %293 = vmatpush1.bf16.msra.mxu0 0
    %294 = vmatprep.subr.bf16.mxu0 0
    %295 = vmatpush1.bf16.msra.mxu0 0
    %296 = vmatprep.subr.bf16.mxu0 0
    %297 = vmatpush1.bf16.msra.mxu0 0
    %298 = vmatprep.subr.bf16.mxu0 0
    %299 = vmatpush1.bf16.msra.mxu0 0
    %300 = vmatprep.subr.bf16.mxu0 0
    %301 = vmatpush1.bf16.msra.mxu0 0
    %302 = vmatprep.mubr.bf16.mxu0 0
    %303 = vmatmul.mubr.bf16.gmra.mrb[0].mxu0 %v205
    %v304 = vpop.f32.mrb[0].mxu0
    %v305 = vadd.f32 0.0, %v304
    %v306 = vpop.f32.mrb[0].mxu0
    %v307 = vpop.f32.mrb[0].mxu0
    %v308 = vadd.f32 0.0, %v307
    %v309 = vpop.f32.mrb[0].mxu0
    %310 = vdwg.mxu0
    %v311 = vadd.f32 %v203, %v305
    %v312 = vadd.f32 %v204, %v308
    %313 = vst [vmem:[#allocation2] sm:$0xff] %v311
    %314 = vst [vmem:[#allocation2 + $0x8] sm:$0xff] %v312
    %v315 = vld [vmem:[#allocation2] sm:$0xff]
    %v316 = vld [vmem:[#allocation2 + $0x8] sm:$0xff]
    %v317 = vld [vmem:[%s4] sm:$0x1]
    %v319 = vlaneseq
    %v320 = vshrl.u32 %v319, 7
    %v321 = vsub.s32 0, %v320
    %v322 = vrot.slane %v317, %v321
    %v324 = vadd.f32 %v315, %v322
    %v325 = vadd.f32 %v316, %v322
    %326 = vst [vmem:[#allocation9] sm:$0xff] %v324
    %327 = vst [vmem:[#allocation9 + $0x8] sm:$0xff] %v325
    // Predicated region
    $region34: #{tpu_custom_call.1} parent=1 // pred_check
      _
    $region35: #{tpu_custom_call.1} parent=1 // pred_check_branch
      %329 = sbr.rel (0) target = $region37
    $region36: #{tpu_custom_call.1} parent=1 // pred_region
      %s331 = ssub.s32 256, 256
      %332 = vsyncadd [#allocation5], %s331
      %s333 = sshll.u32 [#allocation9], 4
      %s334 = int_to_ptr.vmem [resolvable:$true] %s333
      %339 = dma.vmem_to_hbm [thread:$0]  %s334, 256, %s5, [#allocation5], 128, 128, 8
    $region37: #{tpu_custom_call.1} parent=1 // pred_fallthru
      _
    // Predicated region
    $region38: #{tpu_custom_call.1} parent=1 // pred_check
      _
    $region39: #{tpu_custom_call.1} parent=1 // pred_check_branch
      %341 = sbr.rel (0) target = $region41
    $region40: #{tpu_custom_call.1} parent=1 // pred_region
      %342 = dma.done [#allocation5], 256
    $region41: #{tpu_custom_call.1} parent=1 // pred_fallthru
      _
    %343 = vsyncpa [#allocation4], 1
    %344 = vsyncpa [#allocation7], 1
    %345 = vsyncpa [#allocation5], 1

</llo_original>
